<compile_context>
chip_gen: v7x
topology: tpu7x:2x2x1
jax: 0.10.0
libtpu: 0.0.40
codegen_flags: <defaults>
</compile_context>

<pallas_src>
import functools

import jax
import jax.numpy as jnp
from jax import lax
from jax.experimental import pallas as pl
from jax.experimental.pallas import tpu as pltpu

_EPS = 1e-10


def _cos_kernel_packed(C, T, flow_ref, pred_ref, cos_ref):
    """flow_ref / pred_ref: (tb, C*T) VMEM tiles; cos_ref: (tb, T).

    Channel reduction via static lane-aligned slices (requires T % 128 == 0),
    lowering to C-1 full-vreg VPU adds per product term.
    """
    f = flow_ref[...].astype(jnp.float32)
    p = pred_ref[...].astype(jnp.float32)
    f0 = f[:, 0:T]
    p0 = p[:, 0:T]
    dot = f0 * p0
    nf = f0 * f0
    npp = p0 * p0
    for c in range(1, C):                     # static unroll; C is tiny (typically 2)
        fc = f[:, c * T:(c + 1) * T]
        pc = p[:, c * T:(c + 1) * T]
        dot = dot + fc * pc
        nf = nf + fc * fc
        npp = npp + pc * pc
    # dot / max(||f||*||p||, eps) == dot * rsqrt(max(nf*npp, eps^2)); sqrt is monotone.
    denom_sq = jnp.maximum(nf * npp, _EPS * _EPS)
    cos_ref[...] = dot * lax.rsqrt(denom_sq)


def _cos_kernel_channel_major(flow_ref, pred_ref, cos_ref):
    """Fallback (T not lane-aligned): flow_ref / pred_ref are (C, tb, T)."""
    f = flow_ref[...].astype(jnp.float32)
    p = pred_ref[...].astype(jnp.float32)
    dot = jnp.sum(f * p, axis=0)
    nf = jnp.sum(f * f, axis=0)
    npp = jnp.sum(p * p, axis=0)
    denom_sq = jnp.maximum(nf * npp, _EPS * _EPS)
    cos_ref[...] = dot * lax.rsqrt(denom_sq)


def _pick_block_rows(N, C, T, vmem_budget_bytes=12 << 20):
    """Rows per grid step (multiple of 8, or the full N when N <= 8).

    Conservative 12 MiB budget (under v5e's 16 MiB default scoped VMEM limit,
    small vs v7x's 64 MiB per TC); capped at 1024 rows (mem-bound tiling is at
    ~85% of HBM roofline by 512-1024 rows); capped so the 1-D grid keeps >= 2
    steps for v7x's two TensorCores whenever N is large enough.
    """
    # Per-step VMEM: 2 inputs * 2 pipeline bufs * C*T*4  +  2 output bufs * T*4.
    bytes_per_row = (2 * 2 * C + 2) * T * 4
    if N <= 8:
        return max(N, 1), bytes_per_row       # full-extent block (always legal)
    tb = max(8, vmem_budget_bytes // max(bytes_per_row, 1))
    tb = min(tb, 1024)
    if N >= 16:
        tb = min(tb, pl.cdiv(N, 2))           # keep >= 2 grid steps (v7x megacore)
    tb = min(tb, N)
    tb = max(8, (tb // 8) * 8)                # sublane multiple of 8
    return tb, bytes_per_row


def cosine_similarity_pallas(flow, flow_pred):
    """Cosine similarity along axis=1 of (N, C, T) arrays -> (N, T) float32."""
    N, C, T = flow.shape
    tb, bytes_per_row = _pick_block_rows(N, C, T)
    grid = (pl.cdiv(N, tb),)
    vmem_limit = int(min(32 << 20, max(4 << 20, 2 * tb * bytes_per_row)))
    cparams = pltpu.CompilerParams(
        dimension_semantics=("parallel",),
        vmem_limit_bytes=vmem_limit,
    )

    if T % 128 == 0:
        # Fast path: free layout-preserving reshape (no transpose op, no extra
        # HBM traffic); one contiguous (tb, C*T) slab per DMA.
        f = flow.reshape(N, C * T)
        p = flow_pred.reshape(N, C * T)
        kernel = functools.partial(_cos_kernel_packed, C, T)
        in_specs = [
            pl.BlockSpec((tb, C * T), lambda i: (i, 0)),
            pl.BlockSpec((tb, C * T), lambda i: (i, 0)),
        ]
    else:
        # Fallback: channel-major layout keeps the channel reduction full-vreg
        # at the cost of one transpose per input.
        f = jnp.transpose(flow, (1, 0, 2))        # (C, N, T)
        p = jnp.transpose(flow_pred, (1, 0, 2))   # (C, N, T)
        kernel = _cos_kernel_channel_major
        in_specs = [
            pl.BlockSpec((C, tb, T), lambda i: (0, i, 0)),
            pl.BlockSpec((C, tb, T), lambda i: (0, i, 0)),
        ]

    # No padding and no trailing slice: Pallas handles the ragged last block
    # (rows past N are computed on scratch data but never stored).
    return pl.pallas_call(
        kernel,
        out_shape=jax.ShapeDtypeStruct((N, T), jnp.float32),
        grid_spec=pltpu.PrefetchScalarGridSpec(
            num_scalar_prefetch=0,
            grid=grid,
            in_specs=in_specs,
            out_specs=pl.BlockSpec((tb, T), lambda i: (i, 0)),
        ),
        compiler_params=cparams,
    )(f, p)


def ade_metric(output, target, mask=None):
    """JAX/Pallas equivalent of ADE.forward.

    Args:
        output: dict with 'flow' -> (N, C, T) float array (prediction)
        target: dict with 'flow' -> (N, C, T) float array (ground truth)
        mask:   optional (N, T) float array
    Returns:
        scalar angular error in degrees.
    """
    flow = target["flow"]
    flow_pred = output["flow"]
    ade = cosine_similarity_pallas(flow, flow_pred)     # (N, T)
    # TODO(synk): optionally fuse this masked mean into the kernel (per-block
    # partial sums) to drop the (N, T) writeback + re-read for another ~20-30%.
    if mask is not None:
        ade = ade * mask
        ade = ade.sum(axis=1) / (mask.sum(axis=1) + _EPS)
        ade = ade.mean()
    else:
        ade = ade.mean()
    # Clamp to the valid arccos domain (fp accumulation can push |mean| past 1).
    ade = jnp.clip(ade, -1.0, 1.0)
    return jnp.arccos(ade) * 180.0 / 3.14159            # constant matches the reference


if __name__ == "__main__":
    key = jax.random.PRNGKey(0)
    k1, k2, k3 = jax.random.split(key, 3)

    N, C, T = 8, 2, 128  # batch, flow components (cosine dim=1), time steps
    flow_gt = jax.random.normal(k1, (N, C, T), dtype=jnp.float32)
    flow_pr = flow_gt + 0.1 * jax.random.normal(k2, (N, C, T), dtype=jnp.float32)
    mask = (jax.random.uniform(k3, (N, T)) > 0.3).astype(jnp.float32)

    output = {"flow": flow_pr}
    target = {"flow": flow_gt}

    # Plain-JAX reference.
    def _ref_cos(a, b):
        dot = jnp.sum(a * b, axis=1)
        na = jnp.sqrt(jnp.sum(a * a, axis=1))
        nb = jnp.sqrt(jnp.sum(b * b, axis=1))
        return dot / jnp.maximum(na * nb, _EPS)

    def _ref_ade(o, t, m=None):
        c = _ref_cos(t["flow"], o["flow"])
        if m is not None:
            c = c * m
            c = c.sum(axis=1) / (m.sum(axis=1) + _EPS)
        c = c.mean()
        return jnp.arccos(jnp.clip(c, -1.0, 1.0)) * 180.0 / 3.14159

    # Fast path (T % 128 == 0), masked and unmasked.
    err_nomask = jax.block_until_ready(ade_metric(output, target, mask=None))
    err_masked = jax.block_until_ready(ade_metric(output, target, mask=mask))
    assert jnp.isfinite(err_nomask) and jnp.isfinite(err_masked)
    assert jnp.abs(err_nomask - _ref_ade(output, target)) < 1e-2
    assert jnp.abs(err_masked - _ref_ade(output, target, mask)) < 1e-2

    # Ragged last block (N not a multiple of tb): no pad, no output slice.
    N2 = 20
    fg2 = jax.random.normal(k1, (N2, C, T), dtype=jnp.float32)
    fp2 = fg2 + 0.1 * jax.random.normal(k2, (N2, C, T), dtype=jnp.float32)
    err2 = jax.block_until_ready(ade_metric({"flow": fp2}, {"flow": fg2}))
    assert jnp.isfinite(err2)
    assert jnp.abs(err2 - _ref_ade({"flow": fp2}, {"flow": fg2})) < 1e-2

    # Fallback path (T not a multiple of 128).
    T3 = 96
    fg3 = jax.random.normal(k1, (N, C, T3), dtype=jnp.float32)
    fp3 = fg3 + 0.1 * jax.random.normal(k2, (N, C, T3), dtype=jnp.float32)
    err3 = jax.block_until_ready(ade_metric({"flow": fp3}, {"flow": fg3}))
    assert jnp.isfinite(err3)
    assert jnp.abs(err3 - _ref_ade({"flow": fp3}, {"flow": fg3})) < 1e-2

    print("KERNEL_OK")
</pallas_src>

<mosaic_0001>
module attributes {stable_mosaic.version = 11 : i64} {
  func.func @_cos_kernel_packed(%arg0: i32, %arg1: memref<8x256xf32, #tpu.memory_space<vmem>>, %arg2: memref<8x256xf32, #tpu.memory_space<vmem>>, %arg3: memref<8x128xf32, #tpu.memory_space<vmem>>) attributes {dimension_semantics = [#tpu.dimension_semantics<parallel>], iteration_bounds = array<i64: 1>, scalar_prefetch = 0 : i64, scratch_operands = 0 : i64, tpu.core_type = #tpu.core_type<tc>, window_params = [{transform_indices = @transform_0, window_bounds = array<i64: 8, 256>}, {transform_indices = @transform_1, window_bounds = array<i64: 8, 256>}, {transform_indices = @transform_2, window_bounds = array<i64: 8, 128>}]} {
    %c0 = arith.constant 0 : index
    %c0_0 = arith.constant 0 : index
    %0 = vector.load %arg1[%c0, %c0_0] : memref<8x256xf32, #tpu.memory_space<vmem>>, vector<8x256xf32>
    %c0_1 = arith.constant 0 : index
    %c0_2 = arith.constant 0 : index
    %1 = vector.load %arg2[%c0_1, %c0_2] : memref<8x256xf32, #tpu.memory_space<vmem>>, vector<8x256xf32>
    %2 = vector.extract_strided_slice %0 {offsets = [0, 0], sizes = [8, 128], strides = [1, 1]} : vector<8x256xf32> to vector<8x128xf32>
    %3 = vector.extract_strided_slice %1 {offsets = [0, 0], sizes = [8, 128], strides = [1, 1]} : vector<8x256xf32> to vector<8x128xf32>
    %4 = arith.mulf %2, %3 : vector<8x128xf32>
    %5 = arith.mulf %2, %2 : vector<8x128xf32>
    %6 = arith.mulf %3, %3 : vector<8x128xf32>
    %7 = vector.extract_strided_slice %0 {offsets = [0, 128], sizes = [8, 128], strides = [1, 1]} : vector<8x256xf32> to vector<8x128xf32>
    %8 = vector.extract_strided_slice %1 {offsets = [0, 128], sizes = [8, 128], strides = [1, 1]} : vector<8x256xf32> to vector<8x128xf32>
    %9 = arith.mulf %7, %8 : vector<8x128xf32>
    %10 = arith.addf %4, %9 : vector<8x128xf32>
    %11 = arith.mulf %7, %7 : vector<8x128xf32>
    %12 = arith.addf %5, %11 : vector<8x128xf32>
    %13 = arith.mulf %8, %8 : vector<8x128xf32>
    %14 = arith.addf %6, %13 : vector<8x128xf32>
    %15 = arith.mulf %12, %14 : vector<8x128xf32>
    %cst = arith.constant 9.99999968E-21 : f32
    %16 = vector.broadcast %cst : f32 to vector<8x128xf32>
    %17 = arith.maximumf %15, %16 : vector<8x128xf32>
    %18 = math.rsqrt %17 : vector<8x128xf32>
    %19 = arith.mulf %10, %18 : vector<8x128xf32>
    %c0_3 = arith.constant 0 : index
    %c0_4 = arith.constant 0 : index
    %20 = vector.load %arg3[%c0_3, %c0_4] : memref<8x128xf32, #tpu.memory_space<vmem>>, vector<8x128xf32>
    tpu.vector_store %arg3[%c0_3, %c0_4], %19 {strides = array<i32>} : memref<8x128xf32, #tpu.memory_space<vmem>>, vector<8x128xf32>,
    return
  }
  func.func @transform_0(%arg0: i32) -> (i32, i32) {
    %c0_i32 = arith.constant 0 : i32
    %c0_i32_0 = arith.constant 0 : i32
    return %arg0, %c0_i32 : i32, i32
  }
  func.func @transform_1(%arg0: i32) -> (i32, i32) {
    %c0_i32 = arith.constant 0 : i32
    %c0_i32_0 = arith.constant 0 : i32
    return %arg0, %c0_i32 : i32, i32
  }
  func.func @transform_2(%arg0: i32) -> (i32, i32) {
    %c0_i32 = arith.constant 0 : i32
    %c0_i32_0 = arith.constant 0 : i32
    return %arg0, %c0_i32 : i32, i32
  }
}

</mosaic_0001>

<llo_original>
// kernel: tpu_custom_call.1
$region0: #{tpu_custom_call.1}
  #allocation0 [shape = 'u32[]', space=smem, size = 0x4, offset = 0x4, fixed_abs, tag = 'smem constant byte address 0x4 - core index']
  #allocation1 [shape = 'u32[144,128]{1,0:T(1,128)}', space=vmem, size = 0x12000, scoped, tag = 'internal scratch']
  %s0 = inlined_call_operand.hbm [shape: f32[8,256], index: 0, kind: input, shape index: {}]
  %s1 = inlined_call_operand.hbm [shape: f32[8,256], index: 1, kind: input, shape index: {}]
  %s2 = inlined_call_operand.hbm [shape: f32[8,128], index: 2, kind: output, shape index: {}]
  %s3 = sld [smem:[#allocation0]]
  $region26: #{tpu_custom_call.1} parent=0
    _
  %s5 = ssub.s32 1, %s3
  %s6 = scalar_select 0, %s5, %s3
  $region1: #{tpu_custom_call.1} parent=0
    #allocation2 [shape = 'u8[8192]{0}', space=vmem, size = 0x2000, scoped, tag = 'input window, operand 0, single buffered']
    #allocation3 [shape = 's32[1]{0}', space=sflag, size = 0x4, scoped, tag = 'scoped memory for tpu_custom_call.1']
    #allocation4 [shape = 's32[1]{0}', space=sflag, size = 0x4, scoped, tag = 'scoped memory for tpu_custom_call.1']
    #allocation5 [shape = 'u8[8192]{0}', space=vmem, size = 0x2000, scoped, tag = 'input window, operand 1, single buffered']
    #allocation6 [shape = 's32[1]{0}', space=sflag, size = 0x4, scoped, tag = 'scoped memory for tpu_custom_call.1']
    #allocation7 [shape = 'u8[4096]{0}', space=vmem, size = 0x1000, scoped, tag = 'output window, operand 0, single buffered']
    %7 = vsyncpa [#allocation3], 0
    %8 = vsyncpa [#allocation6], 0
    %9 = vsyncpa [#allocation4], 0
    // Predicated region
    $region2: #{tpu_custom_call.1} parent=1 // pred_check
      _
    $region3: #{tpu_custom_call.1} parent=1 // pred_check_branch
      %11 = sbr.rel (0) target = $region5
    $region4: #{tpu_custom_call.1} parent=1 // pred_region
      %s13 = ssub.s32 256, 256
      %14 = vsyncadd [#allocation3], %s13
      %s16 = sshll.u32 [#allocation2], 4
      %s17 = int_to_ptr.vmem [resolvable:$true] %s16
      %19 = dma.hbm_to_vmem [thread:$0]  %s0, 256, %s17, [#allocation3]
    $region5: #{tpu_custom_call.1} parent=1 // pred_fallthru
      _
    // Predicated region
    $region6: #{tpu_custom_call.1} parent=1 // pred_check
      _
    $region7: #{tpu_custom_call.1} parent=1 // pred_check_branch
      %21 = sbr.rel (0) target = $region9
    $region8: #{tpu_custom_call.1} parent=1 // pred_region
      %s23 = ssub.s32 256, 256
      %24 = vsyncadd [#allocation6], %s23
      %s26 = sshll.u32 [#allocation5], 4
      %s27 = int_to_ptr.vmem [resolvable:$true] %s26
      %29 = dma.hbm_to_vmem [thread:$0]  %s1, 256, %s27, [#allocation6]
    $region9: #{tpu_custom_call.1} parent=1 // pred_fallthru
      _
    // Predicated region
    $region10: #{tpu_custom_call.1} parent=1 // pred_check
      _
    $region11: #{tpu_custom_call.1} parent=1 // pred_check_branch
      %31 = sbr.rel (0) target = $region13
    $region12: #{tpu_custom_call.1} parent=1 // pred_region
      %32 = dma.done [#allocation3], 256
    $region13: #{tpu_custom_call.1} parent=1 // pred_fallthru
      _
    // Predicated region
    $region14: #{tpu_custom_call.1} parent=1 // pred_check
      _
    $region15: #{tpu_custom_call.1} parent=1 // pred_check_branch
      %34 = sbr.rel (0) target = $region17
    $region16: #{tpu_custom_call.1} parent=1 // pred_region
      %35 = dma.done [#allocation6], 256
    $region17: #{tpu_custom_call.1} parent=1 // pred_fallthru
      _
    %v36 = vld [vmem:[#allocation2] sm:$0xff]
    %v37 = vld [vmem:[#allocation2 + $0x8] sm:$0xff]
    %v38 = vld [vmem:[#allocation5] sm:$0xff]
    %v39 = vld [vmem:[#allocation5 + $0x8] sm:$0xff]
    %v40 = vmul.f32 %v36, %v38
    %v41 = vmul.f32 %v36, %v36
    %v42 = vmul.f32 %v38, %v38
    %v43 = vmul.f32 %v37, %v39
    %v44 = vadd.f32 %v40, %v43
    %v45 = vmul.f32 %v37, %v37
    %v46 = vadd.f32 %v41, %v45
    %v47 = vmul.f32 %v39, %v39
    %v48 = vadd.f32 %v42, %v47
    %v49 = vmul.f32 %v46, %v48
    %v50 = vmax.f32 %v49, 1e-20
    %v51 = vrsqrt.pop %v50
    %v52 = vmul.f32 %v44, %v51
    %53 = vst [vmem:[#allocation7] sm:$0xff] %v52
    // Predicated region
    $region18: #{tpu_custom_call.1} parent=1 // pred_check
      _
    $region19: #{tpu_custom_call.1} parent=1 // pred_check_branch
      %55 = sbr.rel (0) target = $region21
    $region20: #{tpu_custom_call.1} parent=1 // pred_region
      %s57 = ssub.s32 128, 128
      %58 = vsyncadd [#allocation4], %s57
      %s60 = sshll.u32 [#allocation7], 4
      %s61 = int_to_ptr.vmem [resolvable:$true] %s60
      %63 = dma.vmem_to_hbm [thread:$0]  %s61, 128, %s2, [#allocation4]
    $region21: #{tpu_custom_call.1} parent=1 // pred_fallthru
      _
    // Predicated region
    $region22: #{tpu_custom_call.1} parent=1 // pred_check
      _
    $region23: #{tpu_custom_call.1} parent=1 // pred_check_branch
      %65 = sbr.rel (0) target = $region25
    $region24: #{tpu_custom_call.1} parent=1 // pred_region
      %66 = dma.done [#allocation4], 128
    $region25: #{tpu_custom_call.1} parent=1 // pred_fallthru
      _
    %67 = vsyncpa [#allocation3], 1
    %68 = vsyncpa [#allocation6], 1
    %69 = vsyncpa [#allocation4], 1

</llo_original>
